<compile_context>
chip_gen: v7x
topology: tpu7x:2x2x1
jax: 0.10.0
libtpu: 0.0.40
codegen_flags: <defaults>
</compile_context>

<pallas_src>
import functools
import numpy as np

import jax
import jax.numpy as jnp
from jax import lax
from jax.experimental import pallas as pl
from jax.experimental.pallas import tpu as pltpu


# ---------------------------------------------------------------------------
# Parameter / buffer construction (plain JAX glue, matches the torch buffer)
# ---------------------------------------------------------------------------
def make_positional_encoding(max_len: int, d_model: int) -> jax.Array:
    """Builds the (max_len, 1, d_model) sinusoidal PE buffer (matches torch)."""
    position = jnp.arange(max_len, dtype=jnp.float32)[:, None]          # (L, 1)
    div_term = jnp.exp(
        jnp.arange(0, d_model, 2, dtype=jnp.float32) * (-np.log(10000.0) / d_model)
    )                                                                    # (D/2,)
    pe = jnp.zeros((max_len, d_model), dtype=jnp.float32)
    pe = pe.at[:, 0::2].set(jnp.sin(position * div_term))
    pe = pe.at[:, 1::2].set(jnp.cos(position * div_term))
    return pe[:, None, :]                                                # (L, 1, D)


# ---------------------------------------------------------------------------
# Tile sizing: biggest seq tile that keeps double-buffered footprint small
# ---------------------------------------------------------------------------
def _pick_seq_tile(S: int, B: int, D: int, itemsize: int,
                   vmem_budget_bytes: int = 40 * 1024 * 1024) -> int:
    # VMEM packs the minor-two dims of a (ts, B, D) block into (8, 128) tiles,
    # so small B pads to 8 sublanes; account for that when sizing.
    b_pad = ((B + 7) // 8) * 8
    d_pad = ((D + 127) // 128) * 128
    row_bytes_x = b_pad * d_pad * itemsize        # per seq-row of an x/out tile
    row_bytes_pe = 8 * d_pad * 4                  # pe block (ts, 1, D), f32
    # double-buffered input + double-buffered output + double-buffered pe
    per_row = 2 * row_bytes_x + 2 * row_bytes_x + 2 * row_bytes_pe
    ts = max(1, vmem_budget_bytes // per_row)
    ts = min(ts, 512)                             # ~85% of HBM roofline plateau
    if S > 32:
        ts = min(ts, max(8, S // 4))              # keep >= ~4 grid steps to overlap DMA
    ts = min(ts, S)
    if ts >= 8:
        ts -= ts % 8                              # keep seq tile sublane-aligned
    return max(1, ts)


# ---------------------------------------------------------------------------
# Pallas kernel: y = x + pe (broadcast over batch), optional inverted dropout
# ---------------------------------------------------------------------------
def _pe_dropout_kernel(seed_ref, x_ref, pe_ref, o_ref, *, p: float, training: bool):
    # x_ref  : (ts, B, D) VMEM tile
    # pe_ref : (ts, 1, D) VMEM tile (broadcast over batch axis)
    # Stay in bf16 when the input is bf16 (bf16 VALUs on v6e/v7x); f32 otherwise.
    cdt = jnp.bfloat16 if jnp.dtype(x_ref.dtype) == jnp.dtype(jnp.bfloat16) else jnp.float32
    y = x_ref[...].astype(cdt) + pe_ref[...].astype(cdt)        # (ts, B, D)

    if training and p >= 1.0:
        # Dropout with p >= 1 zeroes everything (avoid uint32 threshold overflow).
        o_ref[...] = jnp.zeros(o_ref.shape, o_ref.dtype)
        return

    if training and p > 0.0:
        # Portable counter-based PRNG: hash(global element index, seed).
        # TODO(synk): cannot bit-match torch's Philox dropout stream; only the
        # Bernoulli(1-p) keep / 1/(1-p) scaling semantics are reproduced.
        ts, B, D = y.shape
        s_iota = lax.broadcasted_iota(jnp.int32, y.shape, 0)
        b_iota = lax.broadcasted_iota(jnp.int32, y.shape, 1)
        d_iota = lax.broadcasted_iota(jnp.int32, y.shape, 2)
        row0 = pl.program_id(0) * ts
        flat = (((row0 + s_iota) * B + b_iota) * D + d_iota).astype(jnp.uint32)

        seed_u = seed_ref[0].astype(jnp.uint32)
        z = flat ^ (seed_u * jnp.uint32(0x9E3779B1) + jnp.uint32(0x85EBCA77))
        # lowbias32 finalizer (good avalanche, pure VALU work hidden under DMA)
        z = z ^ (z >> 16)
        z = z * jnp.uint32(0x7FEB352D)
        z = z ^ (z >> 15)
        z = z * jnp.uint32(0x846CA68B)
        z = z ^ (z >> 16)

        thresh = jnp.uint32(min(int(round(p * 4294967296.0)), 0xFFFFFFFF))
        keep = z >= thresh
        scale = jnp.asarray(1.0 / (1.0 - p), dtype=cdt)
        y = jnp.where(keep, y * scale, jnp.asarray(0.0, dtype=cdt))

    o_ref[...] = y.astype(o_ref.dtype)


# ---------------------------------------------------------------------------
# Wrapper
# ---------------------------------------------------------------------------
def positional_encoding_forward(x, pe, *, p=0.1, training=False, seed=0, ts=None):
    """x: (S, B, D); pe: (max_len, 1, D) float32  ->  (S, B, D)."""
    S, B, D = x.shape
    assert pe.shape[0] >= S and pe.shape[1] == 1 and pe.shape[2] == D

    pe_s = pe[:S]                                   # only the rows we need
    if ts is None:
        ts = _pick_seq_tile(S, B, D, jnp.dtype(x.dtype).itemsize)
    ts = int(min(ts, S))
    grid = (pl.cdiv(S, ts),)
    seed_arr = jnp.asarray([seed], dtype=jnp.int32)

    kernel = functools.partial(_pe_dropout_kernel, p=float(p), training=bool(training))

    itemsize = jnp.dtype(x.dtype).itemsize
    bytes_accessed = 2 * S * B * D * itemsize + S * D * 4      # x read + out write + pe read
    flops = S * B * D * (10 if (training and 0.0 < p < 1.0) else 1)

    return pl.pallas_call(
        kernel,
        out_shape=jax.ShapeDtypeStruct((S, B, D), x.dtype),
        grid_spec=pltpu.PrefetchScalarGridSpec(
            num_scalar_prefetch=1,
            grid=grid,
            in_specs=[
                # x tile: block over seq, full batch + feature dims
                pl.BlockSpec((ts, B, D), lambda i, seed: (i, 0, 0)),
                # pe tile: same seq block, singleton batch dim (broadcast in-kernel)
                pl.BlockSpec((ts, 1, D), lambda i, seed: (i, 0, 0)),
            ],
            out_specs=pl.BlockSpec((ts, B, D), lambda i, seed: (i, 0, 0)),
        ),
        compiler_params=pltpu.CompilerParams(
            # Each seq tile is independent -> v7x can shard across both TCs.
            dimension_semantics=("parallel",),
            # Allow the larger double-buffered tiles (footprint capped ~40 MiB,
            # safe on v7x's 64 MiB physical VMEM; v5e/v6e have 128 MiB).
            vmem_limit_bytes=64 * 1024 * 1024,
        ),
        cost_estimate=pl.CostEstimate(
            flops=int(flops),
            transcendentals=0,
            bytes_accessed=int(bytes_accessed),
        ),
    )(seed_arr, x, pe_s)


# ---------------------------------------------------------------------------
# Demo / self-check
# ---------------------------------------------------------------------------
if __name__ == "__main__":
    SEQ, BATCH, D_MODEL, MAX_LEN = 8, 2, 128, 250
    DROPOUT_P = 0.1

    key = jax.random.PRNGKey(0)
    x = jax.random.normal(key, (SEQ, BATCH, D_MODEL), dtype=jnp.float32)
    pe = make_positional_encoding(MAX_LEN, D_MODEL)

    # Eval mode (dropout is identity) -> must match pure-JAX reference.
    out_eval = positional_encoding_forward(x, pe, p=DROPOUT_P, training=False)
    out_eval = jax.block_until_ready(out_eval)
    ref_eval = x + pe[:SEQ]
    np.testing.assert_allclose(np.asarray(out_eval), np.asarray(ref_eval),
                               rtol=1e-6, atol=1e-6)

    # Train mode: exercise the in-kernel dropout path (hash-based mask).
    out_train = positional_encoding_forward(x, pe, p=DROPOUT_P, training=True, seed=1234)
    out_train = jax.block_until_ready(out_train)
    ot = np.asarray(out_train)
    scaled_ref = np.asarray(ref_eval) * np.float32(1.0 / (1.0 - DROPOUT_P))
    kept = ot != 0.0
    # Every surviving element equals (x+pe)/(1-p); dropped ones are 0.
    np.testing.assert_allclose(ot[kept], scaled_ref[kept], rtol=1e-6, atol=1e-6)
    dropped = int(ot.size - kept.sum())
    assert 0 < dropped < ot.size, f"implausible drop count: {dropped}/{ot.size}"

    print("KERNEL_OK")
</pallas_src>

<mosaic_0001>
module attributes {stable_mosaic.version = 11 : i64} {
  func.func @_pe_dropout_kernel(%arg0: i32, %arg1: memref<1xi32, #tpu.memory_space<smem>>, %arg2: memref<8x2x128xf32, #tpu.memory_space<vmem>>, %arg3: memref<8x1x128xf32, #tpu.memory_space<vmem>>, %arg4: memref<8x2x128xf32, #tpu.memory_space<vmem>>) attributes {dimension_semantics = [#tpu.dimension_semantics<parallel>], iteration_bounds = array<i64: 1>, scalar_prefetch = 1 : i64, scratch_operands = 0 : i64, tpu.core_type = #tpu.core_type<tc>, window_params = [{transform_indices = @transform_0, window_bounds = array<i64: 8, 2, 128>}, {transform_indices = @transform_1, window_bounds = array<i64: 8, 1, 128>}, {transform_indices = @transform_2, window_bounds = array<i64: 8, 2, 128>}]} {
    %c0 = arith.constant 0 : index
    %c0_0 = arith.constant 0 : index
    %c0_1 = arith.constant 0 : index
    %0 = vector.load %arg2[%c0, %c0_0, %c0_1] : memref<8x2x128xf32, #tpu.memory_space<vmem>>, vector<8x2x128xf32>
    %c0_2 = arith.constant 0 : index
    %c0_3 = arith.constant 0 : index
    %c0_4 = arith.constant 0 : index
    %1 = vector.load %arg3[%c0_2, %c0_3, %c0_4] : memref<8x1x128xf32, #tpu.memory_space<vmem>>, vector<8x1x128xf32>
    %2 = vector.broadcast %1 : vector<8x1x128xf32> to vector<8x2x128xf32>
    %3 = arith.addf %0, %2 : vector<8x2x128xf32>
    %c0_5 = arith.constant 0 : index
    %c0_6 = arith.constant 0 : index
    %c0_7 = arith.constant 0 : index
    %4 = vector.load %arg4[%c0_5, %c0_6, %c0_7] : memref<8x2x128xf32, #tpu.memory_space<vmem>>, vector<8x2x128xf32>
    tpu.vector_store %arg4[%c0_5, %c0_6, %c0_7], %3 {strides = array<i32>} : memref<8x2x128xf32, #tpu.memory_space<vmem>>, vector<8x2x128xf32>,
    return
  }
  func.func @transform_0(%arg0: i32, %arg1: memref<1xi32, #tpu.memory_space<smem>>) -> (i32, i32, i32) {
    %c0_i32 = arith.constant 0 : i32
    %c0_i32_0 = arith.constant 0 : i32
    %c0_i32_1 = arith.constant 0 : i32
    return %arg0, %c0_i32, %c0_i32_0 : i32, i32, i32
  }
  func.func @transform_1(%arg0: i32, %arg1: memref<1xi32, #tpu.memory_space<smem>>) -> (i32, i32, i32) {
    %c0_i32 = arith.constant 0 : i32
    %c0_i32_0 = arith.constant 0 : i32
    %c0_i32_1 = arith.constant 0 : i32
    return %arg0, %c0_i32, %c0_i32_0 : i32, i32, i32
  }
  func.func @transform_2(%arg0: i32, %arg1: memref<1xi32, #tpu.memory_space<smem>>) -> (i32, i32, i32) {
    %c0_i32 = arith.constant 0 : i32
    %c0_i32_0 = arith.constant 0 : i32
    %c0_i32_1 = arith.constant 0 : i32
    return %arg0, %c0_i32, %c0_i32_0 : i32, i32, i32
  }
}

</mosaic_0001>

<llo_original>
// kernel: tpu_custom_call.1
$region0: #{tpu_custom_call.1}
  #allocation0 [shape = 'u32[]', space=smem, size = 0x4, offset = 0x4, fixed_abs, tag = 'smem constant byte address 0x4 - core index']
  #allocation1 [shape = 'u32[144,128]{1,0:T(1,128)}', space=vmem, size = 0x12000, scoped, tag = 'internal scratch']
  #allocation2 [shape = 's32[1]{0}', space=sflag, size = 0x4, scoped, tag = 'scoped memory for tpu_custom_call.1']
  #allocation3 [shape = 's32[1]{0:T(128)S(6)}', space=smem, size = 0x200, scoped, tag = 'prefetched SMEM operand 0']
  %s0 = inlined_call_operand.<no memory space> [shape: s32[1], index: 0, kind: input, shape index: {}]
  %s1 = inlined_call_operand.hbm [shape: f32[8,2,128], index: 1, kind: input, shape index: {}]
  %s2 = inlined_call_operand.hbm [shape: f32[8,1,128], index: 2, kind: input, shape index: {}]
  %s3 = inlined_call_operand.hbm [shape: f32[8,2,128], index: 3, kind: output, shape index: {}]
  %s4 = sld [smem:[#allocation0]]
  $region26: #{tpu_custom_call.1} parent=0
    _
  %s6 = ssub.s32 1, %s4
  %s7 = scalar_select 0, %s6, %s4
  %8 = sst [smem:[#allocation3]] %s0
  $region1: #{tpu_custom_call.1} parent=0
    #allocation4 [shape = 'u8[8192]{0}', space=vmem, size = 0x2000, scoped, tag = 'input window, operand 1, single buffered']
    #allocation5 [shape = 's32[1]{0}', space=sflag, size = 0x4, scoped, tag = 'scoped memory for tpu_custom_call.1']
    #allocation6 [shape = 's32[1]{0}', space=sflag, size = 0x4, scoped, tag = 'scoped memory for tpu_custom_call.1']
    #allocation7 [shape = 'u8[4096]{0}', space=vmem, size = 0x1000, scoped, tag = 'input window, operand 2, single buffered']
    #allocation8 [shape = 's32[1]{0}', space=sflag, size = 0x4, scoped, tag = 'scoped memory for tpu_custom_call.1']
    #allocation9 [shape = 'u8[8192]{0}', space=vmem, size = 0x2000, scoped, tag = 'output window, operand 0, single buffered']
    %9 = vsyncpa [#allocation5], 0
    %10 = vsyncpa [#allocation8], 0
    %11 = vsyncpa [#allocation6], 0
    // Predicated region
    $region2: #{tpu_custom_call.1} parent=1 // pred_check
      _
    $region3: #{tpu_custom_call.1} parent=1 // pred_check_branch
      %13 = sbr.rel (0) target = $region5
    $region4: #{tpu_custom_call.1} parent=1 // pred_region
      %s15 = ssub.s32 256, 256
      %16 = vsyncadd [#allocation5], %s15
      %s17 = sshll.u32 [#allocation4], 4
      %s18 = int_to_ptr.vmem [resolvable:$true] %s17
      %23 = dma.hbm_to_vmem [thread:$0]  %s1, 256, %s18, [#allocation5], 32, 32, 2
    $region5: #{tpu_custom_call.1} parent=1 // pred_fallthru
      _
    // Predicated region
    $region6: #{tpu_custom_call.1} parent=1 // pred_check
      _
    $region7: #{tpu_custom_call.1} parent=1 // pred_check_branch
      %25 = sbr.rel (0) target = $region9
    $region8: #{tpu_custom_call.1} parent=1 // pred_region
      %s27 = ssub.s32 128, 128
      %28 = vsyncadd [#allocation8], %s27
      %s29 = sshll.u32 [#allocation7], 4
      %s30 = int_to_ptr.vmem [resolvable:$true] %s29
      %35 = dma.hbm_to_vmem [thread:$0]  %s2, 128, %s30, [#allocation8], 16, 16, 1
    $region9: #{tpu_custom_call.1} parent=1 // pred_fallthru
      _
    // Predicated region
    $region10: #{tpu_custom_call.1} parent=1 // pred_check
      _
    $region11: #{tpu_custom_call.1} parent=1 // pred_check_branch
      %37 = sbr.rel (0) target = $region13
    $region12: #{tpu_custom_call.1} parent=1 // pred_region
      %38 = dma.done [#allocation5], 256
    $region13: #{tpu_custom_call.1} parent=1 // pred_fallthru
      _
    // Predicated region
    $region14: #{tpu_custom_call.1} parent=1 // pred_check
      _
    $region15: #{tpu_custom_call.1} parent=1 // pred_check_branch
      %40 = sbr.rel (0) target = $region17
    $region16: #{tpu_custom_call.1} parent=1 // pred_region
      %41 = dma.done [#allocation8], 128
    $region17: #{tpu_custom_call.1} parent=1 // pred_fallthru
      _
    %v42 = vld [vmem:[#allocation4] sm:$0x3]
    %v43 = vld [vmem:[#allocation4 + $0x2] sm:$0x3]
    %v44 = vld [vmem:[#allocation4 + $0x4] sm:$0x3]
    %v45 = vld [vmem:[#allocation4 + $0x6] sm:$0x3]
    %v46 = vld [vmem:[#allocation4 + $0x8] sm:$0x3]
    %v47 = vld [vmem:[#allocation4 + $0xa] sm:$0x3]
    %v48 = vld [vmem:[#allocation4 + $0xc] sm:$0x3]
    %v49 = vld [vmem:[#allocation4 + $0xe] sm:$0x3]
    %v50 = vld [vmem:[#allocation7] sm:$0x1]
    %v51 = vld [vmem:[#allocation7 + $0x1] sm:$0x1]
    %v52 = vld [vmem:[#allocation7 + $0x2] sm:$0x1]
    %v53 = vld [vmem:[#allocation7 + $0x3] sm:$0x1]
    %v54 = vld [vmem:[#allocation7 + $0x4] sm:$0x1]
    %v55 = vld [vmem:[#allocation7 + $0x5] sm:$0x1]
    %v56 = vld [vmem:[#allocation7 + $0x6] sm:$0x1]
    %v57 = vld [vmem:[#allocation7 + $0x7] sm:$0x1]
    %v66 = vlaneseq
    %v67 = vshrl.u32 %v66, 7
    %v68 = vsub.s32 0, %v67
    %v69 = vrot.slane %v50, %v68
    %v70 = vlaneseq
    %v71 = vshrl.u32 %v70, 7
    %v72 = vsub.s32 0, %v71
    %v73 = vrot.slane %v51, %v72
    %v74 = vlaneseq
    %v75 = vshrl.u32 %v74, 7
    %v76 = vsub.s32 0, %v75
    %v77 = vrot.slane %v52, %v76
    %v78 = vlaneseq
    %v79 = vshrl.u32 %v78, 7
    %v80 = vsub.s32 0, %v79
    %v81 = vrot.slane %v53, %v80
    %v82 = vlaneseq
    %v83 = vshrl.u32 %v82, 7
    %v84 = vsub.s32 0, %v83
    %v85 = vrot.slane %v54, %v84
    %v86 = vlaneseq
    %v87 = vshrl.u32 %v86, 7
    %v88 = vsub.s32 0, %v87
    %v89 = vrot.slane %v55, %v88
    %v90 = vlaneseq
    %v91 = vshrl.u32 %v90, 7
    %v92 = vsub.s32 0, %v91
    %v93 = vrot.slane %v56, %v92
    %v94 = vlaneseq
    %v95 = vshrl.u32 %v94, 7
    %v96 = vsub.s32 0, %v95
    %v97 = vrot.slane %v57, %v96
    %v106 = vadd.f32 %v42, %v69
    %v107 = vadd.f32 %v43, %v73
    %v108 = vadd.f32 %v44, %v77
    %v109 = vadd.f32 %v45, %v81
    %v110 = vadd.f32 %v46, %v85
    %v111 = vadd.f32 %v47, %v89
    %v112 = vadd.f32 %v48, %v93
    %v113 = vadd.f32 %v49, %v97
    %114 = vst [vmem:[#allocation9] sm:$0x3] %v106
    %115 = vst [vmem:[#allocation9 + $0x2] sm:$0x3] %v107
    %116 = vst [vmem:[#allocation9 + $0x4] sm:$0x3] %v108
    %117 = vst [vmem:[#allocation9 + $0x6] sm:$0x3] %v109
    %118 = vst [vmem:[#allocation9 + $0x8] sm:$0x3] %v110
    %119 = vst [vmem:[#allocation9 + $0xa] sm:$0x3] %v111
    %120 = vst [vmem:[#allocation9 + $0xc] sm:$0x3] %v112
    %121 = vst [vmem:[#allocation9 + $0xe] sm:$0x3] %v113
    // Predicated region
    $region18: #{tpu_custom_call.1} parent=1 // pred_check
      _
    $region19: #{tpu_custom_call.1} parent=1 // pred_check_branch
      %123 = sbr.rel (0) target = $region21
    $region20: #{tpu_custom_call.1} parent=1 // pred_region
      %s125 = ssub.s32 256, 256
      %126 = vsyncadd [#allocation6], %s125
      %s127 = sshll.u32 [#allocation9], 4
      %s128 = int_to_ptr.vmem [resolvable:$true] %s127
      %133 = dma.vmem_to_hbm [thread:$0]  %s128, 256, %s3, [#allocation6], 32, 32, 2
    $region21: #{tpu_custom_call.1} parent=1 // pred_fallthru
      _
    // Predicated region
    $region22: #{tpu_custom_call.1} parent=1 // pred_check
      _
    $region23: #{tpu_custom_call.1} parent=1 // pred_check_branch
      %135 = sbr.rel (0) target = $region25
    $region24: #{tpu_custom_call.1} parent=1 // pred_region
      %136 = dma.done [#allocation6], 256
    $region25: #{tpu_custom_call.1} parent=1 // pred_fallthru
      _
    %137 = vsyncpa [#allocation5], 1
    %138 = vsyncpa [#allocation8], 1
    %139 = vsyncpa [#allocation6], 1

</llo_original>
